<compile_context>
chip_gen: v6e
topology: v6e:2x2x1
jax: 0.10.0
libtpu: 0.0.40
codegen_flags: <defaults>
</compile_context>

<pallas_src>
import jax
import jax.numpy as jnp
from jax.experimental import pallas as pl
from jax.experimental.pallas import tpu as pltpu

KH, KW = 3, 3  # fixed 3x3 kernel, stride 1


def _make_kernel(H: int, W: int, pad: int):
    HW = H * W

    def kernel(x_ref, w_ref, m_ref, o_ref, xpad_ref):
        # x_ref   : (B, HW)          flattened images (lane-dense)
        # w_ref   : (3, 3)           conv weights (SMEM scalars)
        # m_ref   : (2, HW)          {0,1} masks: row 0 -> col != 0, row 1 -> col != W-1
        # o_ref   : (B, HW)
        # xpad_ref: (B, HW + 2*pad)  f32 scratch: flat zero halo of `pad` lanes each side
        b = xpad_ref.shape[0]

        # Keep the halo zero, drop the fresh block into the lane-aligned interior.
        zhalo = jnp.zeros((b, pad), jnp.float32)
        xpad_ref[:, 0:pad] = zhalo
        xpad_ref[:, pad + HW:pad + HW + pad] = zhalo
        xpad_ref[:, pad:pad + HW] = x_ref[...].astype(jnp.float32)

        not_first_col = m_ref[0:1, :]   # kills the w==0   column for kw=0 taps
        not_last_col = m_ref[1:2, :]    # kills the w==W-1 column for kw=2 taps

        acc = None
        for kw in range(KW):
            dw = kw - 1
            t = None
            for kh in range(KH):
                base = pad + (kh - 1) * W + dw
                term = xpad_ref[:, base:base + HW] * w_ref[kh, kw]
                t = term if t is None else t + term
            if dw == -1:
                t = t * not_first_col
            elif dw == 1:
                t = t * not_last_col
            acc = t if acc is None else acc + t
        o_ref[...] = acc.astype(o_ref.dtype)

    return kernel


def conv2d_module(x, weight, padding=(1, 1)):
    """Forward pass of Conv2DModule.

    x:      (N, 1, H, W) float32  (NCHW, like PyTorch)
    weight: (1, 1, 3, 3) float32  (OIHW, like PyTorch Conv2d.weight)
    returns (N, 1, H, W) float32
    """
    N, C, H, W = x.shape
    assert C == 1, "Conv2DModule has in_channels=1"
    if tuple(padding) != (1, 1):
        # TODO(synk): fused kernel implements the module's default "same" padding (1,1) only.
        raise NotImplementedError("conv2d_module Pallas kernel supports padding=(1, 1)")

    HW = H * W
    # Flat halo must cover the largest tap offset (W + 1); round up to a lane-aligned width.
    pad = ((W + 1 + 127) // 128) * 128

    x_flat = x.reshape(N, HW)                       # free reshape (contiguous), channel squeezed
    w = weight.reshape(KH, KW).astype(jnp.float32)  # (3, 3) scalars for SMEM

    col = jnp.arange(HW, dtype=jnp.int32) % W
    masks = jnp.stack([col != 0, col != W - 1]).astype(jnp.float32)  # (2, HW)

    # Images per grid step: biggest block fitting a conservative VMEM budget
    # (sized so a double-buffered in+out + scratch fits well under v7x's scoped VMEM).
    itemsize = x.dtype.itemsize
    bytes_per_img = 2 * 2 * HW * itemsize + (HW + 2 * pad) * 4
    budget = 4 * 1024 * 1024
    bb = max(1, budget // bytes_per_img)
    bb = N if bb >= N else max(8, (bb // 8) * 8)

    out_flat = pl.pallas_call(
        _make_kernel(H, W, pad),
        out_shape=jax.ShapeDtypeStruct((N, HW), x.dtype),
        grid=(pl.cdiv(N, bb),),
        in_specs=[
            pl.BlockSpec((bb, HW), lambda g: (g, 0)),               # batch of flattened images
            pl.BlockSpec(memory_space=pltpu.MemorySpace.SMEM),      # tiny 3x3 weight, scalar reads
            pl.BlockSpec((2, HW), lambda g: (0, 0)),                # column masks (grid-invariant)
        ],
        out_specs=pl.BlockSpec((bb, HW), lambda g: (g, 0)),
        scratch_shapes=[pltpu.VMEM((bb, HW + 2 * pad), jnp.float32)],
        compiler_params=pltpu.CompilerParams(
            dimension_semantics=("parallel",),
            vmem_limit_bytes=32 * 1024 * 1024,
        ),
    )(x_flat, w, masks)

    return out_flat.reshape(N, 1, H, W)


if __name__ == "__main__":
    key = jax.random.PRNGKey(0)
    kx, kw = jax.random.split(key)

    # Small shapes consistent with the module: N=2, C=1, H=W=16.
    x = jax.random.normal(kx, (2, 1, 16, 16), dtype=jnp.float32)
    # Deterministic weight init (Kaiming-uniform-like bound 1/sqrt(fan_in)=1/3).
    weight = jax.random.uniform(kw, (1, 1, 3, 3), dtype=jnp.float32,
                                minval=-1.0 / 3.0, maxval=1.0 / 3.0)

    y = conv2d_module(x, weight, padding=(1, 1))
    jax.block_until_ready(y)

    # Cross-check against XLA's conv (same semantics as torch Conv2d).
    ref = jax.lax.conv_general_dilated(
        x, weight, window_strides=(1, 1), padding=((1, 1), (1, 1)),
        dimension_numbers=("NCHW", "OIHW", "NCHW"))
    assert y.shape == ref.shape == (2, 1, 16, 16)
    assert jnp.allclose(y, ref, atol=1e-5, rtol=1e-5)

    print("KERNEL_OK")
</pallas_src>

<mosaic_0001>
module attributes {stable_mosaic.version = 11 : i64} {
  func.func @kernel(%arg0: i32, %arg1: memref<2x256xf32, #tpu.memory_space<vmem>>, %arg2: memref<3x3xf32, #tpu.memory_space<smem>>, %arg3: memref<2x256xf32, #tpu.memory_space<vmem>>, %arg4: memref<2x256xf32, #tpu.memory_space<vmem>>, %arg5: memref<2x512xf32, #tpu.memory_space<vmem>>) attributes {dimension_semantics = [#tpu.dimension_semantics<parallel>], iteration_bounds = array<i64: 1>, scalar_prefetch = 0 : i64, scratch_operands = 1 : i64, tpu.core_type = #tpu.core_type<tc>, window_params = [{transform_indices = @transform_0, window_bounds = array<i64: 2, 256>}, {transform_indices = @transform_1, window_bounds = array<i64: 3, 3>}, {pipeline_mode = #tpu.pipeline_mode<synchronous>, transform_indices = @transform_2, window_bounds = array<i64: 2, 256>}, {transform_indices = @transform_3, window_bounds = array<i64: 2, 256>}]} {
    %cst = arith.constant 0.000000e+00 : f32
    %0 = vector.broadcast %cst : f32 to vector<2x128xf32>
    %c0 = arith.constant 0 : index
    %c0_0 = arith.constant 0 : index
    %1 = vector.load %arg5[%c0, %c0_0] : memref<2x512xf32, #tpu.memory_space<vmem>>, vector<2x128xf32>
    tpu.vector_store %arg5[%c0, %c0_0], %0 {strides = array<i32>} : memref<2x512xf32, #tpu.memory_space<vmem>>, vector<2x128xf32>,
    %c0_1 = arith.constant 0 : index
    %c384 = arith.constant 384 : index
    %2 = vector.load %arg5[%c0_1, %c384] : memref<2x512xf32, #tpu.memory_space<vmem>>, vector<2x128xf32>
    tpu.vector_store %arg5[%c0_1, %c384], %0 {strides = array<i32>} : memref<2x512xf32, #tpu.memory_space<vmem>>, vector<2x128xf32>,
    %c0_2 = arith.constant 0 : index
    %c0_3 = arith.constant 0 : index
    %3 = vector.load %arg1[%c0_2, %c0_3] : memref<2x256xf32, #tpu.memory_space<vmem>>, vector<2x256xf32>
    %c0_4 = arith.constant 0 : index
    %c128 = arith.constant 128 : index
    %4 = vector.load %arg5[%c0_4, %c128] : memref<2x512xf32, #tpu.memory_space<vmem>>, vector<2x256xf32>
    tpu.vector_store %arg5[%c0_4, %c128], %3 {strides = array<i32>} : memref<2x512xf32, #tpu.memory_space<vmem>>, vector<2x256xf32>,
    %c0_5 = arith.constant 0 : index
    %c0_6 = arith.constant 0 : index
    %5 = vector.load %arg3[%c0_5, %c0_6] : memref<2x256xf32, #tpu.memory_space<vmem>>, vector<1x256xf32>
    %c1 = arith.constant 1 : index
    %c0_7 = arith.constant 0 : index
    %6 = vector.load %arg3[%c1, %c0_7] : memref<2x256xf32, #tpu.memory_space<vmem>>, vector<1x256xf32>
    %c0_8 = arith.constant 0 : index
    %c111 = arith.constant 111 : index
    %7 = vector.load %arg5[%c0_8, %c111] : memref<2x512xf32, #tpu.memory_space<vmem>>, vector<2x256xf32>
    %c0_9 = arith.constant 0 : index
    %c0_10 = arith.constant 0 : index
    %8 = memref.load %arg2[%c0_9, %c0_10] : memref<3x3xf32, #tpu.memory_space<smem>>
    %9 = vector.broadcast %8 : f32 to vector<2x256xf32>
    %10 = arith.mulf %7, %9 : vector<2x256xf32>
    %c0_11 = arith.constant 0 : index
    %c127 = arith.constant 127 : index
    %11 = vector.load %arg5[%c0_11, %c127] : memref<2x512xf32, #tpu.memory_space<vmem>>, vector<2x256xf32>
    %c1_12 = arith.constant 1 : index
    %c0_13 = arith.constant 0 : index
    %12 = memref.load %arg2[%c1_12, %c0_13] : memref<3x3xf32, #tpu.memory_space<smem>>
    %13 = vector.broadcast %12 : f32 to vector<2x256xf32>
    %14 = arith.mulf %11, %13 : vector<2x256xf32>
    %15 = arith.addf %10, %14 : vector<2x256xf32>
    %c0_14 = arith.constant 0 : index
    %c143 = arith.constant 143 : index
    %16 = vector.load %arg5[%c0_14, %c143] : memref<2x512xf32, #tpu.memory_space<vmem>>, vector<2x256xf32>
    %c2 = arith.constant 2 : index
    %c0_15 = arith.constant 0 : index
    %17 = memref.load %arg2[%c2, %c0_15] : memref<3x3xf32, #tpu.memory_space<smem>>
    %18 = vector.broadcast %17 : f32 to vector<2x256xf32>
    %19 = arith.mulf %16, %18 : vector<2x256xf32>
    %20 = arith.addf %15, %19 : vector<2x256xf32>
    %21 = vector.broadcast %5 : vector<1x256xf32> to vector<2x256xf32>
    %22 = arith.mulf %20, %21 : vector<2x256xf32>
    %c0_16 = arith.constant 0 : index
    %c112 = arith.constant 112 : index
    %23 = vector.load %arg5[%c0_16, %c112] : memref<2x512xf32, #tpu.memory_space<vmem>>, vector<2x256xf32>
    %c0_17 = arith.constant 0 : index
    %c1_18 = arith.constant 1 : index
    %24 = memref.load %arg2[%c0_17, %c1_18] : memref<3x3xf32, #tpu.memory_space<smem>>
    %25 = vector.broadcast %24 : f32 to vector<2x256xf32>
    %26 = arith.mulf %23, %25 : vector<2x256xf32>
    %c0_19 = arith.constant 0 : index
    %c128_20 = arith.constant 128 : index
    %27 = vector.load %arg5[%c0_19, %c128_20] : memref<2x512xf32, #tpu.memory_space<vmem>>, vector<2x256xf32>
    %c1_21 = arith.constant 1 : index
    %c1_22 = arith.constant 1 : index
    %28 = memref.load %arg2[%c1_21, %c1_22] : memref<3x3xf32, #tpu.memory_space<smem>>
    %29 = vector.broadcast %28 : f32 to vector<2x256xf32>
    %30 = arith.mulf %27, %29 : vector<2x256xf32>
    %31 = arith.addf %26, %30 : vector<2x256xf32>
    %c0_23 = arith.constant 0 : index
    %c144 = arith.constant 144 : index
    %32 = vector.load %arg5[%c0_23, %c144] : memref<2x512xf32, #tpu.memory_space<vmem>>, vector<2x256xf32>
    %c2_24 = arith.constant 2 : index
    %c1_25 = arith.constant 1 : index
    %33 = memref.load %arg2[%c2_24, %c1_25] : memref<3x3xf32, #tpu.memory_space<smem>>
    %34 = vector.broadcast %33 : f32 to vector<2x256xf32>
    %35 = arith.mulf %32, %34 : vector<2x256xf32>
    %36 = arith.addf %31, %35 : vector<2x256xf32>
    %37 = arith.addf %22, %36 : vector<2x256xf32>
    %c0_26 = arith.constant 0 : index
    %c113 = arith.constant 113 : index
    %38 = vector.load %arg5[%c0_26, %c113] : memref<2x512xf32, #tpu.memory_space<vmem>>, vector<2x256xf32>
    %c0_27 = arith.constant 0 : index
    %c2_28 = arith.constant 2 : index
    %39 = memref.load %arg2[%c0_27, %c2_28] : memref<3x3xf32, #tpu.memory_space<smem>>
    %40 = vector.broadcast %39 : f32 to vector<2x256xf32>
    %41 = arith.mulf %38, %40 : vector<2x256xf32>
    %c0_29 = arith.constant 0 : index
    %c129 = arith.constant 129 : index
    %42 = vector.load %arg5[%c0_29, %c129] : memref<2x512xf32, #tpu.memory_space<vmem>>, vector<2x256xf32>
    %c1_30 = arith.constant 1 : index
    %c2_31 = arith.constant 2 : index
    %43 = memref.load %arg2[%c1_30, %c2_31] : memref<3x3xf32, #tpu.memory_space<smem>>
    %44 = vector.broadcast %43 : f32 to vector<2x256xf32>
    %45 = arith.mulf %42, %44 : vector<2x256xf32>
    %46 = arith.addf %41, %45 : vector<2x256xf32>
    %c0_32 = arith.constant 0 : index
    %c145 = arith.constant 145 : index
    %47 = vector.load %arg5[%c0_32, %c145] : memref<2x512xf32, #tpu.memory_space<vmem>>, vector<2x256xf32>
    %c2_33 = arith.constant 2 : index
    %c2_34 = arith.constant 2 : index
    %48 = memref.load %arg2[%c2_33, %c2_34] : memref<3x3xf32, #tpu.memory_space<smem>>
    %49 = vector.broadcast %48 : f32 to vector<2x256xf32>
    %50 = arith.mulf %47, %49 : vector<2x256xf32>
    %51 = arith.addf %46, %50 : vector<2x256xf32>
    %52 = vector.broadcast %6 : vector<1x256xf32> to vector<2x256xf32>
    %53 = arith.mulf %51, %52 : vector<2x256xf32>
    %54 = arith.addf %37, %53 : vector<2x256xf32>
    %c0_35 = arith.constant 0 : index
    %c0_36 = arith.constant 0 : index
    %55 = vector.load %arg4[%c0_35, %c0_36] : memref<2x256xf32, #tpu.memory_space<vmem>>, vector<2x256xf32>
    tpu.vector_store %arg4[%c0_35, %c0_36], %54 {strides = array<i32>} : memref<2x256xf32, #tpu.memory_space<vmem>>, vector<2x256xf32>,
    return
  }
  func.func @transform_0(%arg0: i32) -> (i32, i32) {
    %c0_i32 = arith.constant 0 : i32
    %c0_i32_0 = arith.constant 0 : i32
    return %arg0, %c0_i32 : i32, i32
  }
  func.func @transform_1(%arg0: i32) -> (i32, i32) {
    %c0_i32 = arith.constant 0 : i32
    %c0_i32_0 = arith.constant 0 : i32
    %c0_i32_1 = arith.constant 0 : i32
    return %c0_i32, %c0_i32_0 : i32, i32
  }
  func.func @transform_2(%arg0: i32) -> (i32, i32) {
    %c0_i32 = arith.constant 0 : i32
    %c0_i32_0 = arith.constant 0 : i32
    %c0_i32_1 = arith.constant 0 : i32
    return %c0_i32, %c0_i32_0 : i32, i32
  }
  func.func @transform_3(%arg0: i32) -> (i32, i32) {
    %c0_i32 = arith.constant 0 : i32
    %c0_i32_0 = arith.constant 0 : i32
    return %arg0, %c0_i32 : i32, i32
  }
}

</mosaic_0001>

<llo_original>
// kernel: tpu_custom_call.1
$region0: #{tpu_custom_call.1}
  #allocation0 [shape = 'u32[]', space=smem, size = 0x4, offset = 0x4, fixed_abs, tag = 'smem constant byte address 0x4 - core index']
  #allocation1 [shape = 'u32[144,128]{1,0:T(1,128)}', space=vmem, size = 0x12000, scoped, tag = 'internal scratch']
  #allocation2 [shape = 'f32[2,512]{1,0:T(2,128)}', space=vmem, size = 0x1000, scoped, tag = 'scratch operand']
  %s0 = inlined_call_operand.hbm [shape: f32[2,256], index: 0, kind: input, shape index: {}]
  %s1 = inlined_call_operand.hbm [shape: f32[3,3], index: 1, kind: input, shape index: {}]
  %s2 = inlined_call_operand.hbm [shape: f32[2,256], index: 2, kind: input, shape index: {}]
  %s3 = inlined_call_operand.hbm [shape: f32[2,256], index: 3, kind: output, shape index: {}]
  %s4 = sld [smem:[#allocation0]]
  $region34: #{tpu_custom_call.1} parent=0
    _
  %s6 = ssub.s32 1, %s4
  %s7 = scalar_select 0, %s6, %s4
  $region1: #{tpu_custom_call.1} parent=0
    #allocation3 [shape = 'u8[2048]{0}', space=vmem, size = 0x800, scoped, tag = 'input window, operand 0, single buffered']
    #allocation4 [shape = 's32[1]{0}', space=sflag, size = 0x4, scoped, tag = 'scoped memory for tpu_custom_call.1']
    #allocation5 [shape = 's32[1]{0}', space=sflag, size = 0x4, scoped, tag = 'scoped memory for tpu_custom_call.1']
    #allocation6 [shape = 's32[1]{0}', space=sflag, size = 0x4, scoped, tag = 'scoped memory for tpu_custom_call.1']
    #allocation7 [shape = 'u8[2048]{0}', space=smem, size = 0x800, scoped, tag = 'input window, operand 1, single buffered']
    #allocation8 [shape = 'u8[2048]{0}', space=vmem, size = 0x800, scoped, tag = 'input window, operand 2, single buffered']
    #allocation9 [shape = 's32[1]{0}', space=sflag, size = 0x4, scoped, tag = 'scoped memory for tpu_custom_call.1']
    #allocation10 [shape = 'u8[2048]{0}', space=vmem, size = 0x800, scoped, tag = 'output window, operand 0, single buffered']
    %8 = vsyncpa [#allocation4], 0
    %9 = vsyncpa [#allocation6], 0
    %10 = vsyncpa [#allocation9], 0
    %11 = vsyncpa [#allocation5], 0
    // Predicated region
    $region2: #{tpu_custom_call.1} parent=1 // pred_check
      _
    $region3: #{tpu_custom_call.1} parent=1 // pred_check_branch
      %13 = sbr.rel (0) target = $region5
    $region4: #{tpu_custom_call.1} parent=1 // pred_region
      %s15 = ssub.s32 64, 64
      %16 = vsyncadd [#allocation4], %s15
      %s18 = sshll.u32 [#allocation3], 4
      %s19 = int_to_ptr.vmem [resolvable:$true] %s18
      %21 = dma.hbm_to_vmem [thread:$0]  %s0, 64, %s19, [#allocation4]
    $region5: #{tpu_custom_call.1} parent=1 // pred_fallthru
      _
    // Predicated region
    $region6: #{tpu_custom_call.1} parent=1 // pred_check
      _
    $region7: #{tpu_custom_call.1} parent=1 // pred_check_branch
      %23 = sbr.rel (0) target = $region9
    $region8: #{tpu_custom_call.1} parent=1 // pred_region
      %s25 = ssub.s32 64, 64
      %26 = vsyncadd [#allocation6], %s25
      %29 = dma.hbm_to_smem %s1, 64, [#allocation7], [#allocation6]
    $region9: #{tpu_custom_call.1} parent=1 // pred_fallthru
      _
    // Predicated region
    $region10: #{tpu_custom_call.1} parent=1 // pred_check
      _
    $region11: #{tpu_custom_call.1} parent=1 // pred_check_branch
      %31 = sbr.rel (0) target = $region13
    $region12: #{tpu_custom_call.1} parent=1 // pred_region
      %s33 = ssub.s32 64, 64
      %34 = vsyncadd [#allocation9], %s33
      %s36 = sshll.u32 [#allocation8], 4
      %s37 = int_to_ptr.vmem [resolvable:$true] %s36
      %39 = dma.hbm_to_vmem [thread:$0]  %s2, 64, %s37, [#allocation9]
    $region13: #{tpu_custom_call.1} parent=1 // pred_fallthru
      _
    // Predicated region
    $region14: #{tpu_custom_call.1} parent=1 // pred_check
      _
    $region15: #{tpu_custom_call.1} parent=1 // pred_check_branch
      %41 = sbr.rel (0) target = $region17
    $region16: #{tpu_custom_call.1} parent=1 // pred_region
      %42 = dma.done [#allocation4], 64
    $region17: #{tpu_custom_call.1} parent=1 // pred_fallthru
      _
    // Predicated region
    $region18: #{tpu_custom_call.1} parent=1 // pred_check
      _
    $region19: #{tpu_custom_call.1} parent=1 // pred_check_branch
      %44 = sbr.rel (0) target = $region21
    $region20: #{tpu_custom_call.1} parent=1 // pred_region
      %45 = dma.done [#allocation6], 64
    $region21: #{tpu_custom_call.1} parent=1 // pred_fallthru
      _
    // Predicated region
    $region22: #{tpu_custom_call.1} parent=1 // pred_check
      _
    $region23: #{tpu_custom_call.1} parent=1 // pred_check_branch
      %47 = sbr.rel (0) target = $region25
    $region24: #{tpu_custom_call.1} parent=1 // pred_region
      %48 = dma.done [#allocation9], 64
    $region25: #{tpu_custom_call.1} parent=1 // pred_fallthru
      _
    %49 = sfence
    %50 = vst [vmem:[#allocation2] sm:$0x3] 0.0
    %51 = vst [vmem:[#allocation2 + $0x6] sm:$0x3] 0.0
    %v52 = vld [vmem:[#allocation3] sm:$0xf]
    %53 = vst [vmem:[#allocation2 + $0x2] sm:$0xf] %v52
    %v54 = vld [vmem:[#allocation8] ss:$2 sm:$0x3]
    %s55 = scalar_lea.vmem [#allocation8], 1
    %v56 = vld [vmem:[%s55] ss:$2 sm:$0x3]
    %v57 = vld [vmem:[#allocation2] sm:$0x3f]
    %s58 = sld [smem:[#allocation7]]
    %v59 = vstv %s58
    %v60 = vmul.f32 %v57, %v59
    %s61 = sld [smem:[#allocation7 + $0x80]]
    %v62 = vstv %s61
    %v63 = vmul.f32 %v57, %v62
    %65 = vrot.lane.b32.xlu0 %v63, 112
    %v66 = vpop.permute.xlu0 %65
    %v67 = vrot.slane %v66, 2
    %vm68 = vcmask 916480
    %v69 = vsel %vm68, %v66, %v67
    %v71 = vadd.f32 %v60, %v69
    %v72 = vld [vmem:[#allocation2 + $0x2] sm:$0x3f]
    %s73 = sld [smem:[#allocation7 + $0x100]]
    %v74 = vstv %s73
    %v75 = vmul.f32 %v72, %v74
    %77 = vrot.lane.b32.xlu0 %v75, 96
    %v78 = vpop.permute.xlu0 %77
    %v79 = vrot.slane %v78, 6
    %vm80 = vcmask 785408
    %v81 = vsel %vm80, %v79, %v78
    %v83 = vadd.f32 %v71, %v81
    %v85 = vlaneseq
    %v86 = vshrl.u32 %v85, 7
    %v87 = vsub.s32 0, %v86
    %v88 = vrot.slane %v54, %v87
    %v89 = vlaneseq
    %v90 = vshrl.u32 %v89, 7
    %v91 = vsub.s32 1, %v90
    %v92 = vrot.slane %v54, %v91
    %v93 = vcombine.low %v88, %v92
    %v95 = vunpack.c.l.s4 1983009808
    %v96 = vunpack.c.0.s8 %v95
    %v97 = vlaneseq
    %v98 = vshrl.u32 %v97, 7
    %v99 = vsub.s32 %v96, %v98
    %v100 = vrot.slane %v93, %v99
    %101 = vrot.lane.b32.xlu0 %v100, 111
    %v102 = vpop.permute.xlu0 %101
    %v103 = vrot.slane %v102, 6
    %vm104 = vcmask 908288
    %v105 = vsel %vm104, %v103, %v102
    %v107 = vmul.f32 %v83, %v105
    %v108 = vld [vmem:[#allocation2] sm:$0x3f]
    %s109 = sld [smem:[#allocation7 + $0x1]]
    %v110 = vstv %s109
    %v111 = vmul.f32 %v108, %v110
    %v112 = vld [vmem:[#allocation2 + $0x2] sm:$0xf]
    %s113 = sld [smem:[#allocation7 + $0x81]]
    %v114 = vstv %s113
    %v115 = vmul.f32 %v112, %v114
    %117 = vrot.lane.b32.xlu0 %v115, 112
    %v118 = vpop.permute.xlu0 %117
    %v119 = vrot.slane %v118, 6
    %v120 = vsel %vm68, %v119, %v118
    %v122 = vadd.f32 %v111, %v120
    %v123 = vld [vmem:[#allocation2 + $0x2] sm:$0x3f]
    %s124 = sld [smem:[#allocation7 + $0x101]]
    %v125 = vstv %s124
    %v126 = vmul.f32 %v123, %v125
    %128 = vrot.lane.b32.xlu0 %v126, 96
    %v129 = vpop.permute.xlu0 %128
    %v130 = vrot.slane %v129, 6
    %v131 = vsel %vm80, %v130, %v129
    %v133 = vadd.f32 %v122, %v131
    %135 = vrot.lane.b32.xlu0 %v133, 127
    %v136 = vpop.permute.xlu0 %135
    %v137 = vrot.slane %v136, 2
    %vm138 = vcmask 1039360
    %v139 = vsel %vm138, %v136, %v137
    %v141 = vadd.f32 %v107, %v139
    %s142 = sld [smem:[#allocation7 + $0x2]]
    %v143 = vstv %s142
    %v144 = vmul.f32 %v108, %v143
    %s145 = sld [smem:[#allocation7 + $0x82]]
    %v146 = vstv %s145
    %v147 = vmul.f32 %v123, %v146
    %149 = vrot.lane.b32.xlu0 %v147, 112
    %v150 = vpop.permute.xlu0 %149
    %v151 = vrot.slane %v150, 6
    %v152 = vsel %vm68, %v151, %v150
    %v154 = vadd.f32 %v144, %v152
    %s155 = sld [smem:[#allocation7 + $0x102]]
    %v156 = vstv %s155
    %v157 = vmul.f32 %v123, %v156
    %159 = vrot.lane.b32.xlu0 %v157, 96
    %v160 = vpop.permute.xlu0 %159
    %v161 = vrot.slane %v160, 6
    %v162 = vsel %vm80, %v161, %v160
    %v164 = vadd.f32 %v154, %v162
    %v166 = vlaneseq
    %v167 = vshrl.u32 %v166, 7
    %v168 = vsub.s32 0, %v167
    %v169 = vrot.slane %v56, %v168
    %v170 = vlaneseq
    %v171 = vshrl.u32 %v170, 7
    %v172 = vsub.s32 1, %v171
    %v173 = vrot.slane %v56, %v172
    %v174 = vcombine.low %v169, %v173
    %v176 = vunpack.c.l.s4 1983009808
    %v177 = vunpack.c.0.s8 %v176
    %v178 = vlaneseq
    %v179 = vshrl.u32 %v178, 7
    %v180 = vsub.s32 %v177, %v179
    %v181 = vrot.slane %v174, %v180
    %182 = vrot.lane.b32.xlu0 %v181, 113
    %v183 = vpop.permute.xlu0 %182
    %v184 = vrot.slane %v183, 6
    %vm185 = vcmask 924672
    %v186 = vsel %vm185, %v184, %v183
    %v188 = vmul.f32 %v164, %v186
    %190 = vrot.lane.b32.xlu0 %v188, 126
    %v191 = vpop.permute.xlu0 %190
    %v192 = vrot.slane %v191, 2
    %vm193 = vcmask 1031168
    %v194 = vsel %vm193, %v191, %v192
    %v196 = vadd.f32 %v141, %v194
    %198 = vrot.lane.b32.xlu0 %v196, 17
    %v199 = vpop.permute.xlu0 %198
    %v200 = vrot.slane %v199, 2
    %vm201 = vcmask 138240
    %v202 = vsel %vm201, %v199, %v200
    %204 = vst [vmem:[#allocation10] sm:$0xf] %v202
    // Predicated region
    $region26: #{tpu_custom_call.1} parent=1 // pred_check
      _
    $region27: #{tpu_custom_call.1} parent=1 // pred_check_branch
      %206 = sbr.rel (0) target = $region29
    $region28: #{tpu_custom_call.1} parent=1 // pred_region
      %s208 = ssub.s32 64, 64
      %209 = vsyncadd [#allocation5], %s208
      %s211 = sshll.u32 [#allocation10], 4
      %s212 = int_to_ptr.vmem [resolvable:$true] %s211
      %214 = dma.vmem_to_hbm [thread:$0]  %s212, 64, %s3, [#allocation5]
    $region29: #{tpu_custom_call.1} parent=1 // pred_fallthru
      _
    // Predicated region
    $region30: #{tpu_custom_call.1} parent=1 // pred_check
      _
    $region31: #{tpu_custom_call.1} parent=1 // pred_check_branch
      %216 = sbr.rel (0) target = $region33
    $region32: #{tpu_custom_call.1} parent=1 // pred_region
      %217 = dma.done [#allocation5], 64
    $region33: #{tpu_custom_call.1} parent=1 // pred_fallthru
      _
    %218 = vsyncpa [#allocation4], 1
    %219 = vsyncpa [#allocation9], 1
    %220 = vsyncpa [#allocation5], 1
    %221 = vsyncpa [#allocation6], 1

</llo_original>
